<compile_context>
chip_gen: v6e
topology: v6e:2x2x1
jax: 0.10.0
libtpu: 0.0.40
codegen_flags: <defaults>
</compile_context>

<pallas_src>
import math

import jax
import jax.numpy as jnp
from jax.experimental import pallas as pl
from jax.experimental.pallas import tpu as pltpu

_NEG = -1e30  # bias for padded classifier lanes -> exp() == 0 in the softmax sum


def _lstm_kernel(x_ref, h0_ref, c0_ref, wx_ref, wh_ref, b_ref,
                 wcls_ref, bcls_ref,
                 out_ref, h_out_ref, c_out_ref):
    """Whole-sequence LSTM + classifier, single invocation (no grid).

    x_ref:    (T*B, I)   time-major, batch already padded to a multiple of 8
    h0/c0:    (B, H)
    wx_ref:   (I, 4H)    gates stacked [i | f | c | o] along the lane axis
    wh_ref:   (H, 4H)
    b_ref:    (1, 4H)
    wcls_ref: (H, O_pad) classifier weight, O padded to 128 lanes (zeros)
    bcls_ref: (1, O_pad) padded lanes hold a large negative bias
    """
    B, H = h0_ref.shape
    T = x_ref.shape[0] // B

    # Hoisted input projection (no recurrent dependency): one MXU matmul for
    # all timesteps, with the gate bias folded in here, off the serial chain.
    gx = jnp.dot(x_ref[...], wx_ref[...],
                 preferred_element_type=jnp.float32) + b_ref[...]

    wh = wh_ref[...]
    h = h0_ref[...]
    c = c0_ref[...]

    # T is small and static: fully unrolled at trace time; h/c stay in vregs.
    # The only per-step MXU op is the (B, H) x (H, 4H) recurrent matmul.
    for t in range(T):
        gates = gx[t * B:(t + 1) * B, :] + jnp.dot(
            h, wh, preferred_element_type=jnp.float32)

        # Full-width nonlinearities on the (B, 4H) vreg, then static lane
        # slices per gate.
        sg = jax.nn.sigmoid(gates)
        th = jnp.tanh(gates)
        i_t = sg[:, 0 * H:1 * H]
        f_t = sg[:, 1 * H:2 * H]
        g_t = th[:, 2 * H:3 * H]
        o_t = sg[:, 3 * H:4 * H]

        c = f_t * c + i_t * g_t
        h = o_t * jnp.tanh(c)

    h_out_ref[...] = h
    c_out_ref[...] = c

    # Classifier: Linear(H -> O_pad) + LogSoftmax over the lane axis.  Padded
    # lanes carry a -1e30 bias so they contribute exp(.) == 0 to the sum and
    # never influence the valid lanes.
    logits = jnp.dot(h, wcls_ref[...],
                     preferred_element_type=jnp.float32) + bcls_ref[...]
    m = jnp.max(logits, axis=1, keepdims=True)
    z = logits - m
    lse = jnp.log(jnp.sum(jnp.exp(z), axis=1, keepdims=True))
    out_ref[...] = z - lse


def _round_up(n, m):
    return ((n + m - 1) // m) * m


@jax.jit
def lstm_model_forward(x_btd, h0, c0, w_x, w_h, b, w_cls, b_cls):
    """x_btd: (B, T, I) as in PyTorch; returns (log_probs (B,O), h_t (B,H), c_t (B,H))."""
    B, T, I = x_btd.shape
    H = h0.shape[1]
    O = w_cls.shape[1]

    Bp = _round_up(B, 8)     # sublane-dense batch
    Op = _round_up(O, 128)   # lane-dense classifier output store

    # Time-major + batch pad, then flatten to (T*Bp, I) for the hoisted x-proj.
    x_tbd = jnp.transpose(x_btd, (1, 0, 2))
    x_tbd = jnp.pad(x_tbd, ((0, 0), (0, Bp - B), (0, 0)))
    x2d = x_tbd.reshape(T * Bp, I)

    h0p = jnp.pad(h0, ((0, Bp - B), (0, 0)))
    c0p = jnp.pad(c0, ((0, Bp - B), (0, 0)))
    w_cls_p = jnp.pad(w_cls, ((0, 0), (0, Op - O)))
    b_cls_p = jnp.pad(b_cls, ((0, 0), (0, Op - O)), constant_values=_NEG)

    vmem = pl.BlockSpec(memory_space=pltpu.MemorySpace.VMEM)

    out, h_t, c_t = pl.pallas_call(
        _lstm_kernel,
        out_shape=(
            jax.ShapeDtypeStruct((Bp, Op), jnp.float32),
            jax.ShapeDtypeStruct((Bp, H), jnp.float32),
            jax.ShapeDtypeStruct((Bp, H), jnp.float32),
        ),
        in_specs=[vmem] * 8,
        out_specs=(vmem, vmem, vmem),
    )(x2d, h0p, c0p, w_x, w_h, b, w_cls_p, b_cls_p)

    return out[:B, :O], h_t[:B], c_t[:B]


def _reference_forward(x_btd, h0, c0, w_x, w_h, b, w_cls, b_cls):
    """Pure-JAX reference mirroring the PyTorch forward, for validation."""
    B, T, I = x_btd.shape
    H = h0.shape[1]
    h_t, c_t = h0, c0
    for t in range(T):
        x = x_btd[:, t, :]
        gates = x @ w_x + h_t @ w_h + b
        i_t = jax.nn.sigmoid(gates[:, 0 * H:1 * H])
        f_t = jax.nn.sigmoid(gates[:, 1 * H:2 * H])
        g_t = jnp.tanh(gates[:, 2 * H:3 * H])
        o_t = jax.nn.sigmoid(gates[:, 3 * H:4 * H])
        c_t = f_t * c_t + i_t * g_t
        h_t = o_t * jnp.tanh(c_t)
    logits = h_t @ w_cls + b_cls
    out = jax.nn.log_softmax(logits, axis=1)
    return out, h_t, c_t


if __name__ == "__main__":
    # Small shapes consistent with the module's forward.
    B, T, I, H, O = 2, 8, 16, 32, 10

    key = jax.random.PRNGKey(0)
    keys = jax.random.split(key, 8)
    stdv = 1.0 / math.sqrt(H)

    # Gate weights stacked as [i | f | c | o] along the last axis (synthetic
    # init matching the uniform(-stdv, stdv) init of LSTMBlock).
    w_x = jax.random.uniform(keys[0], (I, 4 * H), jnp.float32, -stdv, stdv)
    w_h = jax.random.uniform(keys[1], (H, 4 * H), jnp.float32, -stdv, stdv)
    b = jax.random.uniform(keys[2], (1, 4 * H), jnp.float32, -stdv, stdv)
    # Classifier Linear(H, O): stored as (H, O) so y = h @ W + b.
    w_cls = jax.random.uniform(keys[3], (H, O), jnp.float32, -stdv, stdv)
    b_cls = jax.random.uniform(keys[4], (1, O), jnp.float32, -stdv, stdv)

    x = jax.random.normal(keys[5], (B, T, I), jnp.float32)
    h0 = jnp.zeros((B, H), jnp.float32)  # init_hidden()
    c0 = jnp.zeros((B, H), jnp.float32)

    out, h_t, c_t = lstm_model_forward(x, h0, c0, w_x, w_h, b, w_cls, b_cls)
    jax.block_until_ready((out, h_t, c_t))

    ref_out, ref_h, ref_c = _reference_forward(x, h0, c0, w_x, w_h, b, w_cls, b_cls)
    assert jnp.allclose(out, ref_out, atol=1e-5, rtol=1e-5)
    assert jnp.allclose(h_t, ref_h, atol=1e-5, rtol=1e-5)
    assert jnp.allclose(c_t, ref_c, atol=1e-5, rtol=1e-5)

    print("KERNEL_OK")
</pallas_src>

<mosaic_0001>
module attributes {stable_mosaic.version = 11 : i64} {
  func.func @_lstm_kernel(%arg0: memref<64x16xf32, #tpu.memory_space<vmem>>, %arg1: memref<8x32xf32, #tpu.memory_space<vmem>>, %arg2: memref<8x32xf32, #tpu.memory_space<vmem>>, %arg3: memref<16x128xf32, #tpu.memory_space<vmem>>, %arg4: memref<32x128xf32, #tpu.memory_space<vmem>>, %arg5: memref<1x128xf32, #tpu.memory_space<vmem>>, %arg6: memref<32x128xf32, #tpu.memory_space<vmem>>, %arg7: memref<1x128xf32, #tpu.memory_space<vmem>>, %arg8: memref<8x128xf32, #tpu.memory_space<vmem>>, %arg9: memref<8x32xf32, #tpu.memory_space<vmem>>, %arg10: memref<8x32xf32, #tpu.memory_space<vmem>>) attributes {dimension_semantics = [], scalar_prefetch = 0 : i64, scratch_operands = 0 : i64, tpu.core_type = #tpu.core_type<tc>} {
    %c0 = arith.constant 0 : index
    %c0_0 = arith.constant 0 : index
    %0 = vector.load %arg0[%c0, %c0_0] : memref<64x16xf32, #tpu.memory_space<vmem>>, vector<64x16xf32>
    %c0_1 = arith.constant 0 : index
    %c0_2 = arith.constant 0 : index
    %1 = vector.load %arg3[%c0_1, %c0_2] : memref<16x128xf32, #tpu.memory_space<vmem>>, vector<16x128xf32>
    %cst = arith.constant dense<0.000000e+00> : vector<64x128xf32>
    %2 = tpu.matmul %0, %1, %cst {dimension_numbers = #tpu.dot_dimension_numbers<[1], [0], [0], [1], [0, 0, 1, 1], [], []>} : vector<64x16xf32>, vector<16x128xf32>, vector<64x128xf32> -> vector<64x128xf32>
    %c0_3 = arith.constant 0 : index
    %c0_4 = arith.constant 0 : index
    %3 = vector.load %arg5[%c0_3, %c0_4] : memref<1x128xf32, #tpu.memory_space<vmem>>, vector<1x128xf32>
    %4 = vector.broadcast %3 : vector<1x128xf32> to vector<64x128xf32>
    %5 = arith.addf %2, %4 : vector<64x128xf32>
    %c0_5 = arith.constant 0 : index
    %c0_6 = arith.constant 0 : index
    %6 = vector.load %arg4[%c0_5, %c0_6] : memref<32x128xf32, #tpu.memory_space<vmem>>, vector<32x128xf32>
    %c0_7 = arith.constant 0 : index
    %c0_8 = arith.constant 0 : index
    %7 = vector.load %arg1[%c0_7, %c0_8] : memref<8x32xf32, #tpu.memory_space<vmem>>, vector<8x32xf32>
    %c0_9 = arith.constant 0 : index
    %c0_10 = arith.constant 0 : index
    %8 = vector.load %arg2[%c0_9, %c0_10] : memref<8x32xf32, #tpu.memory_space<vmem>>, vector<8x32xf32>
    %9 = vector.extract_strided_slice %5 {offsets = [0, 0], sizes = [8, 128], strides = [1, 1]} : vector<64x128xf32> to vector<8x128xf32>
    %cst_11 = arith.constant dense<0.000000e+00> : vector<8x128xf32>
    %10 = tpu.matmul %7, %6, %cst_11 {dimension_numbers = #tpu.dot_dimension_numbers<[1], [0], [0], [1], [0, 0, 1, 1], [], []>} : vector<8x32xf32>, vector<32x128xf32>, vector<8x128xf32> -> vector<8x128xf32>
    %11 = arith.addf %9, %10 : vector<8x128xf32>
    %12 = arith.negf %11 : vector<8x128xf32>
    %13 = math.exp %12 : vector<8x128xf32>
    %cst_12 = arith.constant 1.000000e+00 : f32
    %14 = vector.broadcast %cst_12 : f32 to vector<8x128xf32>
    %15 = arith.addf %14, %13 : vector<8x128xf32>
    %16 = arith.divf %14, %15 : vector<8x128xf32>
    %17 = math.tanh %11 : vector<8x128xf32>
    %18 = vector.extract_strided_slice %16 {offsets = [0, 0], sizes = [8, 32], strides = [1, 1]} : vector<8x128xf32> to vector<8x32xf32>
    %19 = vector.extract_strided_slice %16 {offsets = [0, 32], sizes = [8, 32], strides = [1, 1]} : vector<8x128xf32> to vector<8x32xf32>
    %20 = vector.extract_strided_slice %17 {offsets = [0, 64], sizes = [8, 32], strides = [1, 1]} : vector<8x128xf32> to vector<8x32xf32>
    %21 = vector.extract_strided_slice %16 {offsets = [0, 96], sizes = [8, 32], strides = [1, 1]} : vector<8x128xf32> to vector<8x32xf32>
    %22 = arith.mulf %19, %8 : vector<8x32xf32>
    %23 = arith.mulf %18, %20 : vector<8x32xf32>
    %24 = arith.addf %22, %23 : vector<8x32xf32>
    %25 = math.tanh %24 : vector<8x32xf32>
    %26 = arith.mulf %21, %25 : vector<8x32xf32>
    %27 = vector.extract_strided_slice %5 {offsets = [8, 0], sizes = [8, 128], strides = [1, 1]} : vector<64x128xf32> to vector<8x128xf32>
    %cst_13 = arith.constant dense<0.000000e+00> : vector<8x128xf32>
    %28 = tpu.matmul %26, %6, %cst_13 {dimension_numbers = #tpu.dot_dimension_numbers<[1], [0], [0], [1], [0, 0, 1, 1], [], []>} : vector<8x32xf32>, vector<32x128xf32>, vector<8x128xf32> -> vector<8x128xf32>
    %29 = arith.addf %27, %28 : vector<8x128xf32>
    %30 = arith.negf %29 : vector<8x128xf32>
    %31 = math.exp %30 : vector<8x128xf32>
    %cst_14 = arith.constant 1.000000e+00 : f32
    %32 = vector.broadcast %cst_14 : f32 to vector<8x128xf32>
    %33 = arith.addf %32, %31 : vector<8x128xf32>
    %34 = arith.divf %32, %33 : vector<8x128xf32>
    %35 = math.tanh %29 : vector<8x128xf32>
    %36 = vector.extract_strided_slice %34 {offsets = [0, 0], sizes = [8, 32], strides = [1, 1]} : vector<8x128xf32> to vector<8x32xf32>
    %37 = vector.extract_strided_slice %34 {offsets = [0, 32], sizes = [8, 32], strides = [1, 1]} : vector<8x128xf32> to vector<8x32xf32>
    %38 = vector.extract_strided_slice %35 {offsets = [0, 64], sizes = [8, 32], strides = [1, 1]} : vector<8x128xf32> to vector<8x32xf32>
    %39 = vector.extract_strided_slice %34 {offsets = [0, 96], sizes = [8, 32], strides = [1, 1]} : vector<8x128xf32> to vector<8x32xf32>
    %40 = arith.mulf %37, %24 : vector<8x32xf32>
    %41 = arith.mulf %36, %38 : vector<8x32xf32>
    %42 = arith.addf %40, %41 : vector<8x32xf32>
    %43 = math.tanh %42 : vector<8x32xf32>
    %44 = arith.mulf %39, %43 : vector<8x32xf32>
    %45 = vector.extract_strided_slice %5 {offsets = [16, 0], sizes = [8, 128], strides = [1, 1]} : vector<64x128xf32> to vector<8x128xf32>
    %cst_15 = arith.constant dense<0.000000e+00> : vector<8x128xf32>
    %46 = tpu.matmul %44, %6, %cst_15 {dimension_numbers = #tpu.dot_dimension_numbers<[1], [0], [0], [1], [0, 0, 1, 1], [], []>} : vector<8x32xf32>, vector<32x128xf32>, vector<8x128xf32> -> vector<8x128xf32>
    %47 = arith.addf %45, %46 : vector<8x128xf32>
    %48 = arith.negf %47 : vector<8x128xf32>
    %49 = math.exp %48 : vector<8x128xf32>
    %cst_16 = arith.constant 1.000000e+00 : f32
    %50 = vector.broadcast %cst_16 : f32 to vector<8x128xf32>
    %51 = arith.addf %50, %49 : vector<8x128xf32>
    %52 = arith.divf %50, %51 : vector<8x128xf32>
    %53 = math.tanh %47 : vector<8x128xf32>
    %54 = vector.extract_strided_slice %52 {offsets = [0, 0], sizes = [8, 32], strides = [1, 1]} : vector<8x128xf32> to vector<8x32xf32>
    %55 = vector.extract_strided_slice %52 {offsets = [0, 32], sizes = [8, 32], strides = [1, 1]} : vector<8x128xf32> to vector<8x32xf32>
    %56 = vector.extract_strided_slice %53 {offsets = [0, 64], sizes = [8, 32], strides = [1, 1]} : vector<8x128xf32> to vector<8x32xf32>
    %57 = vector.extract_strided_slice %52 {offsets = [0, 96], sizes = [8, 32], strides = [1, 1]} : vector<8x128xf32> to vector<8x32xf32>
    %58 = arith.mulf %55, %42 : vector<8x32xf32>
    %59 = arith.mulf %54, %56 : vector<8x32xf32>
    %60 = arith.addf %58, %59 : vector<8x32xf32>
    %61 = math.tanh %60 : vector<8x32xf32>
    %62 = arith.mulf %57, %61 : vector<8x32xf32>
    %63 = vector.extract_strided_slice %5 {offsets = [24, 0], sizes = [8, 128], strides = [1, 1]} : vector<64x128xf32> to vector<8x128xf32>
    %cst_17 = arith.constant dense<0.000000e+00> : vector<8x128xf32>
    %64 = tpu.matmul %62, %6, %cst_17 {dimension_numbers = #tpu.dot_dimension_numbers<[1], [0], [0], [1], [0, 0, 1, 1], [], []>} : vector<8x32xf32>, vector<32x128xf32>, vector<8x128xf32> -> vector<8x128xf32>
    %65 = arith.addf %63, %64 : vector<8x128xf32>
    %66 = arith.negf %65 : vector<8x128xf32>
    %67 = math.exp %66 : vector<8x128xf32>
    %cst_18 = arith.constant 1.000000e+00 : f32
    %68 = vector.broadcast %cst_18 : f32 to vector<8x128xf32>
    %69 = arith.addf %68, %67 : vector<8x128xf32>
    %70 = arith.divf %68, %69 : vector<8x128xf32>
    %71 = math.tanh %65 : vector<8x128xf32>
    %72 = vector.extract_strided_slice %70 {offsets = [0, 0], sizes = [8, 32], strides = [1, 1]} : vector<8x128xf32> to vector<8x32xf32>
    %73 = vector.extract_strided_slice %70 {offsets = [0, 32], sizes = [8, 32], strides = [1, 1]} : vector<8x128xf32> to vector<8x32xf32>
    %74 = vector.extract_strided_slice %71 {offsets = [0, 64], sizes = [8, 32], strides = [1, 1]} : vector<8x128xf32> to vector<8x32xf32>
    %75 = vector.extract_strided_slice %70 {offsets = [0, 96], sizes = [8, 32], strides = [1, 1]} : vector<8x128xf32> to vector<8x32xf32>
    %76 = arith.mulf %73, %60 : vector<8x32xf32>
    %77 = arith.mulf %72, %74 : vector<8x32xf32>
    %78 = arith.addf %76, %77 : vector<8x32xf32>
    %79 = math.tanh %78 : vector<8x32xf32>
    %80 = arith.mulf %75, %79 : vector<8x32xf32>
    %81 = vector.extract_strided_slice %5 {offsets = [32, 0], sizes = [8, 128], strides = [1, 1]} : vector<64x128xf32> to vector<8x128xf32>
    %cst_19 = arith.constant dense<0.000000e+00> : vector<8x128xf32>
    %82 = tpu.matmul %80, %6, %cst_19 {dimension_numbers = #tpu.dot_dimension_numbers<[1], [0], [0], [1], [0, 0, 1, 1], [], []>} : vector<8x32xf32>, vector<32x128xf32>, vector<8x128xf32> -> vector<8x128xf32>
    %83 = arith.addf %81, %82 : vector<8x128xf32>
    %84 = arith.negf %83 : vector<8x128xf32>
    %85 = math.exp %84 : vector<8x128xf32>
    %cst_20 = arith.constant 1.000000e+00 : f32
    %86 = vector.broadcast %cst_20 : f32 to vector<8x128xf32>
    %87 = arith.addf %86, %85 : vector<8x128xf32>
    %88 = arith.divf %86, %87 : vector<8x128xf32>
    %89 = math.tanh %83 : vector<8x128xf32>
    %90 = vector.extract_strided_slice %88 {offsets = [0, 0], sizes = [8, 32], strides = [1, 1]} : vector<8x128xf32> to vector<8x32xf32>
    %91 = vector.extract_strided_slice %88 {offsets = [0, 32], sizes = [8, 32], strides = [1, 1]} : vector<8x128xf32> to vector<8x32xf32>
    %92 = vector.extract_strided_slice %89 {offsets = [0, 64], sizes = [8, 32], strides = [1, 1]} : vector<8x128xf32> to vector<8x32xf32>
    %93 = vector.extract_strided_slice %88 {offsets = [0, 96], sizes = [8, 32], strides = [1, 1]} : vector<8x128xf32> to vector<8x32xf32>
    %94 = arith.mulf %91, %78 : vector<8x32xf32>
    %95 = arith.mulf %90, %92 : vector<8x32xf32>
    %96 = arith.addf %94, %95 : vector<8x32xf32>
    %97 = math.tanh %96 : vector<8x32xf32>
    %98 = arith.mulf %93, %97 : vector<8x32xf32>
    %99 = vector.extract_strided_slice %5 {offsets = [40, 0], sizes = [8, 128], strides = [1, 1]} : vector<64x128xf32> to vector<8x128xf32>
    %cst_21 = arith.constant dense<0.000000e+00> : vector<8x128xf32>
    %100 = tpu.matmul %98, %6, %cst_21 {dimension_numbers = #tpu.dot_dimension_numbers<[1], [0], [0], [1], [0, 0, 1, 1], [], []>} : vector<8x32xf32>, vector<32x128xf32>, vector<8x128xf32> -> vector<8x128xf32>
    %101 = arith.addf %99, %100 : vector<8x128xf32>
    %102 = arith.negf %101 : vector<8x128xf32>
    %103 = math.exp %102 : vector<8x128xf32>
    %cst_22 = arith.constant 1.000000e+00 : f32
    %104 = vector.broadcast %cst_22 : f32 to vector<8x128xf32>
    %105 = arith.addf %104, %103 : vector<8x128xf32>
    %106 = arith.divf %104, %105 : vector<8x128xf32>
    %107 = math.tanh %101 : vector<8x128xf32>
    %108 = vector.extract_strided_slice %106 {offsets = [0, 0], sizes = [8, 32], strides = [1, 1]} : vector<8x128xf32> to vector<8x32xf32>
    %109 = vector.extract_strided_slice %106 {offsets = [0, 32], sizes = [8, 32], strides = [1, 1]} : vector<8x128xf32> to vector<8x32xf32>
    %110 = vector.extract_strided_slice %107 {offsets = [0, 64], sizes = [8, 32], strides = [1, 1]} : vector<8x128xf32> to vector<8x32xf32>
    %111 = vector.extract_strided_slice %106 {offsets = [0, 96], sizes = [8, 32], strides = [1, 1]} : vector<8x128xf32> to vector<8x32xf32>
    %112 = arith.mulf %109, %96 : vector<8x32xf32>
    %113 = arith.mulf %108, %110 : vector<8x32xf32>
    %114 = arith.addf %112, %113 : vector<8x32xf32>
    %115 = math.tanh %114 : vector<8x32xf32>
    %116 = arith.mulf %111, %115 : vector<8x32xf32>
    %117 = vector.extract_strided_slice %5 {offsets = [48, 0], sizes = [8, 128], strides = [1, 1]} : vector<64x128xf32> to vector<8x128xf32>
    %cst_23 = arith.constant dense<0.000000e+00> : vector<8x128xf32>
    %118 = tpu.matmul %116, %6, %cst_23 {dimension_numbers = #tpu.dot_dimension_numbers<[1], [0], [0], [1], [0, 0, 1, 1], [], []>} : vector<8x32xf32>, vector<32x128xf32>, vector<8x128xf32> -> vector<8x128xf32>
    %119 = arith.addf %117, %118 : vector<8x128xf32>
    %120 = arith.negf %119 : vector<8x128xf32>
    %121 = math.exp %120 : vector<8x128xf32>
    %cst_24 = arith.constant 1.000000e+00 : f32
    %122 = vector.broadcast %cst_24 : f32 to vector<8x128xf32>
    %123 = arith.addf %122, %121 : vector<8x128xf32>
    %124 = arith.divf %122, %123 : vector<8x128xf32>
    %125 = math.tanh %119 : vector<8x128xf32>
    %126 = vector.extract_strided_slice %124 {offsets = [0, 0], sizes = [8, 32], strides = [1, 1]} : vector<8x128xf32> to vector<8x32xf32>
    %127 = vector.extract_strided_slice %124 {offsets = [0, 32], sizes = [8, 32], strides = [1, 1]} : vector<8x128xf32> to vector<8x32xf32>
    %128 = vector.extract_strided_slice %125 {offsets = [0, 64], sizes = [8, 32], strides = [1, 1]} : vector<8x128xf32> to vector<8x32xf32>
    %129 = vector.extract_strided_slice %124 {offsets = [0, 96], sizes = [8, 32], strides = [1, 1]} : vector<8x128xf32> to vector<8x32xf32>
    %130 = arith.mulf %127, %114 : vector<8x32xf32>
    %131 = arith.mulf %126, %128 : vector<8x32xf32>
    %132 = arith.addf %130, %131 : vector<8x32xf32>
    %133 = math.tanh %132 : vector<8x32xf32>
    %134 = arith.mulf %129, %133 : vector<8x32xf32>
    %135 = vector.extract_strided_slice %5 {offsets = [56, 0], sizes = [8, 128], strides = [1, 1]} : vector<64x128xf32> to vector<8x128xf32>
    %cst_25 = arith.constant dense<0.000000e+00> : vector<8x128xf32>
    %136 = tpu.matmul %134, %6, %cst_25 {dimension_numbers = #tpu.dot_dimension_numbers<[1], [0], [0], [1], [0, 0, 1, 1], [], []>} : vector<8x32xf32>, vector<32x128xf32>, vector<8x128xf32> -> vector<8x128xf32>
    %137 = arith.addf %135, %136 : vector<8x128xf32>
    %138 = arith.negf %137 : vector<8x128xf32>
    %139 = math.exp %138 : vector<8x128xf32>
    %cst_26 = arith.constant 1.000000e+00 : f32
    %140 = vector.broadcast %cst_26 : f32 to vector<8x128xf32>
    %141 = arith.addf %140, %139 : vector<8x128xf32>
    %142 = arith.divf %140, %141 : vector<8x128xf32>
    %143 = math.tanh %137 : vector<8x128xf32>
    %144 = vector.extract_strided_slice %142 {offsets = [0, 0], sizes = [8, 32], strides = [1, 1]} : vector<8x128xf32> to vector<8x32xf32>
    %145 = vector.extract_strided_slice %142 {offsets = [0, 32], sizes = [8, 32], strides = [1, 1]} : vector<8x128xf32> to vector<8x32xf32>
    %146 = vector.extract_strided_slice %143 {offsets = [0, 64], sizes = [8, 32], strides = [1, 1]} : vector<8x128xf32> to vector<8x32xf32>
    %147 = vector.extract_strided_slice %142 {offsets = [0, 96], sizes = [8, 32], strides = [1, 1]} : vector<8x128xf32> to vector<8x32xf32>
    %148 = arith.mulf %145, %132 : vector<8x32xf32>
    %149 = arith.mulf %144, %146 : vector<8x32xf32>
    %150 = arith.addf %148, %149 : vector<8x32xf32>
    %151 = math.tanh %150 : vector<8x32xf32>
    %152 = arith.mulf %147, %151 : vector<8x32xf32>
    %c0_27 = arith.constant 0 : index
    %c0_28 = arith.constant 0 : index
    %153 = vector.load %arg9[%c0_27, %c0_28] : memref<8x32xf32, #tpu.memory_space<vmem>>, vector<8x32xf32>
    tpu.vector_store %arg9[%c0_27, %c0_28], %152 {strides = array<i32>} : memref<8x32xf32, #tpu.memory_space<vmem>>, vector<8x32xf32>,
    %c0_29 = arith.constant 0 : index
    %c0_30 = arith.constant 0 : index
    %154 = vector.load %arg10[%c0_29, %c0_30] : memref<8x32xf32, #tpu.memory_space<vmem>>, vector<8x32xf32>
    tpu.vector_store %arg10[%c0_29, %c0_30], %150 {strides = array<i32>} : memref<8x32xf32, #tpu.memory_space<vmem>>, vector<8x32xf32>,
    %c0_31 = arith.constant 0 : index
    %c0_32 = arith.constant 0 : index
    %155 = vector.load %arg6[%c0_31, %c0_32] : memref<32x128xf32, #tpu.memory_space<vmem>>, vector<32x128xf32>
    %cst_33 = arith.constant dense<0.000000e+00> : vector<8x128xf32>
    %156 = tpu.matmul %152, %155, %cst_33 {dimension_numbers = #tpu.dot_dimension_numbers<[1], [0], [0], [1], [0, 0, 1, 1], [], []>} : vector<8x32xf32>, vector<32x128xf32>, vector<8x128xf32> -> vector<8x128xf32>
    %c0_34 = arith.constant 0 : index
    %c0_35 = arith.constant 0 : index
    %157 = vector.load %arg7[%c0_34, %c0_35] : memref<1x128xf32, #tpu.memory_space<vmem>>, vector<1x128xf32>
    %158 = vector.broadcast %157 : vector<1x128xf32> to vector<8x128xf32>
    %159 = arith.addf %156, %158 : vector<8x128xf32>
    %cst_36 = arith.constant dense<0xFF800000> : vector<8xf32>
    %160 = vector.multi_reduction <maximumf>, %159, %cst_36 [1] : vector<8x128xf32> to vector<8xf32>
    %161 = vector.shape_cast %160 : vector<8xf32> to vector<8x1xf32>
    %162 = vector.broadcast %161 : vector<8x1xf32> to vector<8x128xf32>
    %163 = arith.subf %159, %162 : vector<8x128xf32>
    %164 = math.exp %163 : vector<8x128xf32>
    %cst_37 = arith.constant dense<0.000000e+00> : vector<8xf32>
    %165 = vector.multi_reduction <add>, %164, %cst_37 [1] : vector<8x128xf32> to vector<8xf32>
    %166 = vector.shape_cast %165 : vector<8xf32> to vector<8x1xf32>
    %167 = math.log %166 : vector<8x1xf32>
    %168 = vector.broadcast %167 : vector<8x1xf32> to vector<8x128xf32>
    %169 = arith.subf %163, %168 : vector<8x128xf32>
    %c0_38 = arith.constant 0 : index
    %c0_39 = arith.constant 0 : index
    %170 = vector.load %arg8[%c0_38, %c0_39] : memref<8x128xf32, #tpu.memory_space<vmem>>, vector<8x128xf32>
    tpu.vector_store %arg8[%c0_38, %c0_39], %169 {strides = array<i32>} : memref<8x128xf32, #tpu.memory_space<vmem>>, vector<8x128xf32>,
    return
  }
}

</mosaic_0001>

<llo_original>
// kernel: lstm_model_forward.1
$region0: #{lstm_model_forward.1}
  #allocation0 [shape = 'u32[]', space=smem, size = 0x4, offset = 0x4, fixed_abs, tag = 'smem constant byte address 0x4 - core index']
  #allocation1 [shape = 'u32[144,128]{1,0:T(1,128)}', space=vmem, size = 0x12000, scoped, tag = 'internal scratch']
  %s0 = inlined_call_operand.vmem [shape: f32[64,16], index: 0, kind: input, shape index: {}]
  %s1 = inlined_call_operand.vmem [shape: f32[8,32], index: 1, kind: input, shape index: {}]
  %s2 = inlined_call_operand.vmem [shape: f32[8,32], index: 2, kind: input, shape index: {}]
  %s3 = inlined_call_operand.vmem [shape: f32[16,128], index: 3, kind: input, shape index: {}]
  %s4 = inlined_call_operand.vmem [shape: f32[32,128], index: 4, kind: input, shape index: {}]
  %s5 = inlined_call_operand.vmem [shape: f32[1,128], index: 5, kind: input, shape index: {}]
  %s6 = inlined_call_operand.vmem [shape: f32[32,128], index: 6, kind: input, shape index: {}]
  %s7 = inlined_call_operand.vmem [shape: f32[1,128], index: 7, kind: input, shape index: {}]
  %s8 = inlined_call_operand.vmem [shape: f32[8,128], index: 8, kind: output, shape index: {0}]
  %s9 = inlined_call_operand.vmem [shape: f32[8,32], index: 9, kind: output, shape index: {1}]
  %s10 = inlined_call_operand.vmem [shape: f32[8,32], index: 10, kind: output, shape index: {2}]
  %11 = xla_tuple %s8, %s9, %s10
  %s12 = sld [smem:[#allocation0]]
  $region58: #{lstm_model_forward.1} parent=0
    _
  %s14 = ssub.s32 1, %s12
  %s15 = scalar_select 0, %s14, %s12
  // Predicated region
  $region2: #{lstm_model_forward.1} parent=0 // pred_check
    _
  $region3: #{lstm_model_forward.1} parent=0 // pred_check_branch
    %17 = sbr.rel (0) target = $region5
  $region4: #{lstm_model_forward.1} parent=0 // pred_region
    _
  $region5: #{lstm_model_forward.1} parent=0 // pred_fallthru
    _
  // Predicated region
  $region6: #{lstm_model_forward.1} parent=0 // pred_check
    _
  $region7: #{lstm_model_forward.1} parent=0 // pred_check_branch
    %19 = sbr.rel (0) target = $region9
  $region8: #{lstm_model_forward.1} parent=0 // pred_region
    _
  $region9: #{lstm_model_forward.1} parent=0 // pred_fallthru
    _
  // Predicated region
  $region10: #{lstm_model_forward.1} parent=0 // pred_check
    _
  $region11: #{lstm_model_forward.1} parent=0 // pred_check_branch
    %21 = sbr.rel (0) target = $region13
  $region12: #{lstm_model_forward.1} parent=0 // pred_region
    _
  $region13: #{lstm_model_forward.1} parent=0 // pred_fallthru
    _
  // Predicated region
  $region14: #{lstm_model_forward.1} parent=0 // pred_check
    _
  $region15: #{lstm_model_forward.1} parent=0 // pred_check_branch
    %23 = sbr.rel (0) target = $region17
  $region16: #{lstm_model_forward.1} parent=0 // pred_region
    _
  $region17: #{lstm_model_forward.1} parent=0 // pred_fallthru
    _
  // Predicated region
  $region18: #{lstm_model_forward.1} parent=0 // pred_check
    _
  $region19: #{lstm_model_forward.1} parent=0 // pred_check_branch
    %25 = sbr.rel (0) target = $region21
  $region20: #{lstm_model_forward.1} parent=0 // pred_region
    _
  $region21: #{lstm_model_forward.1} parent=0 // pred_fallthru
    _
  // Predicated region
  $region22: #{lstm_model_forward.1} parent=0 // pred_check
    _
  $region23: #{lstm_model_forward.1} parent=0 // pred_check_branch
    %27 = sbr.rel (0) target = $region25
  $region24: #{lstm_model_forward.1} parent=0 // pred_region
    _
  $region25: #{lstm_model_forward.1} parent=0 // pred_fallthru
    _
  // Predicated region
  $region26: #{lstm_model_forward.1} parent=0 // pred_check
    _
  $region27: #{lstm_model_forward.1} parent=0 // pred_check_branch
    %29 = sbr.rel (0) target = $region29
  $region28: #{lstm_model_forward.1} parent=0 // pred_region
    _
  $region29: #{lstm_model_forward.1} parent=0 // pred_fallthru
    _
  // Predicated region
  $region30: #{lstm_model_forward.1} parent=0 // pred_check
    _
  $region31: #{lstm_model_forward.1} parent=0 // pred_check_branch
    %31 = sbr.rel (0) target = $region33
  $region32: #{lstm_model_forward.1} parent=0 // pred_region
    _
  $region33: #{lstm_model_forward.1} parent=0 // pred_fallthru
    _
  %v32 = vld [vmem:[%s0] sm:$0xff]
  %v33 = vld [vmem:[%s0 + $0x8] sm:$0xff]
  %v34 = vld [vmem:[%s0 + $0x10] sm:$0xff]
  %v35 = vld [vmem:[%s0 + $0x18] sm:$0xff]
  %v36 = vld [vmem:[%s0 + $0x20] sm:$0xff]
  %v37 = vld [vmem:[%s0 + $0x28] sm:$0xff]
  %v38 = vld [vmem:[%s0 + $0x30] sm:$0xff]
  %v39 = vld [vmem:[%s0 + $0x38] sm:$0xff]
  %v40 = vld [vmem:[%s3] sm:$0xff]
  %v41 = vld [vmem:[%s3 + $0x8] sm:$0xff]
  %v42 = vld [vmem:[%s5] sm:$0x1]
  %v44 = vlaneseq
  %v45 = vshrl.u32 %v44, 7
  %v46 = vsub.s32 0, %v45
  %v47 = vrot.slane %v42, %v46
  %vm49 = vcmask 130048
  %v51 = vsel %vm49, %v32, 0
  %v54 = vsel %vm49, %v33, 0
  %v57 = vsel %vm49, %v34, 0
  %v60 = vsel %vm49, %v35, 0
  %v63 = vsel %vm49, %v36, 0
  %v66 = vsel %vm49, %v37, 0
  %v69 = vsel %vm49, %v38, 0
  %v72 = vsel %vm49, %v39, 0
  %74 = vmatprep.subr.mxu0 0.0
  %75 = vmatpush1.msra.mxu0 0.0
  %76 = vmatprep.subr.mxu0 0.0
  %77 = vmatpush1.msra.mxu0 0.0
  %78 = vmatprep.subr.mxu0 0.0
  %79 = vmatpush1.msra.mxu0 0.0
  %80 = vmatprep.subr.mxu0 0.0
  %81 = vmatpush1.msra.mxu0 0.0
  %82 = vmatprep.subr.mxu0 0.0
  %83 = vmatpush1.msra.mxu0 0.0
  %84 = vmatprep.subr.mxu0 0.0
  %85 = vmatpush1.msra.mxu0 0.0
  %86 = vmatprep.subr.mxu0 0.0
  %87 = vmatpush1.msra.mxu0 0.0
  %88 = vmatprep.subr.mxu0 0.0
  %89 = vmatpush1.msra.mxu0 0.0
  %90 = vmatprep.subr.mxu0 0.0
  %91 = vmatpush1.msra.mxu0 0.0
  %92 = vmatprep.subr.mxu0 0.0
  %93 = vmatpush1.msra.mxu0 0.0
  %94 = vmatprep.subr.mxu0 0.0
  %95 = vmatpush1.msra.mxu0 0.0
  %96 = vmatprep.subr.mxu0 0.0
  %97 = vmatpush1.msra.mxu0 0.0
  %98 = vmatprep.subr.mxu0 0.0
  %99 = vmatpush1.msra.mxu0 0.0
  %100 = vmatprep.subr.mxu0 0.0
  %101 = vmatpush1.msra.mxu0 0.0
  %102 = vmatprep.subr.mxu0 0.0
  %103 = vmatpush1.msra.mxu0 %v41
  %104 = vmatprep.subr.mxu0 0.0
  %105 = vmatpush1.msra.mxu0 %v40
  %106 = vmatprep.subr.mxu0 0.0
  %107 = vmatpush2.msra.mxu0 0.0
  %108 = vmatprep.subr.mxu0 0.0
  %109 = vmatpush2.msra.mxu0 0.0
  %110 = vmatprep.subr.mxu0 0.0
  %111 = vmatpush2.msra.mxu0 0.0
  %112 = vmatprep.subr.mxu0 0.0
  %113 = vmatpush2.msra.mxu0 0.0
  %114 = vmatprep.subr.mxu0 0.0
  %115 = vmatpush2.msra.mxu0 0.0
  %116 = vmatprep.subr.mxu0 0.0
  %117 = vmatpush2.msra.mxu0 0.0
  %118 = vmatprep.subr.mxu0 0.0
  %119 = vmatpush2.msra.mxu0 0.0
  %120 = vmatprep.subr.mxu0 0.0
  %121 = vmatpush2.msra.mxu0 0.0
  %122 = vmatprep.subr.mxu0 0.0
  %123 = vmatpush2.msra.mxu0 0.0
  %124 = vmatprep.subr.mxu0 0.0
  %125 = vmatpush2.msra.mxu0 0.0
  %126 = vmatprep.subr.mxu0 0.0
  %127 = vmatpush2.msra.mxu0 0.0
  %128 = vmatprep.subr.mxu0 0.0
  %129 = vmatpush2.msra.mxu0 0.0
  %130 = vmatprep.subr.mxu0 0.0
  %131 = vmatpush2.msra.mxu0 0.0
  %132 = vmatprep.subr.mxu0 0.0
  %133 = vmatpush2.msra.mxu0 0.0
  %134 = vmatprep.subr.mxu0 0.0
  %135 = vmatpush2.msra.mxu0 0.0
  %136 = vmatprep.subr.mxu0 0.0
  %137 = vmatpush2.msra.mxu0 0.0
  %138 = vmatprep.mubr.f32.mxu0 0.0
  %139 = vmatmul.mubr.f32.gmra.mxu0 %v51
  %v140 = vpop.f32.mrf.mxu0
  %v141 = vadd.f32 %v47, %v140
  %v142 = vpop.f32.mrf.mxu0
  %143 = vmatprep.mubr.f32.mxu0 0.0
  %144 = vmatmul.mubr.f32.gmra.mxu0 %v54
  %v145 = vpop.f32.mrf.mxu0
  %v146 = vadd.f32 %v47, %v145
  %v147 = vpop.f32.mrf.mxu0
  %148 = vmatprep.mubr.f32.mxu0 0.0
  %149 = vmatmul.mubr.f32.gmra.mxu0 %v57
  %v150 = vpop.f32.mrf.mxu0
  %v151 = vadd.f32 %v47, %v150
  %v152 = vpop.f32.mrf.mxu0
  %153 = vmatprep.mubr.f32.mxu0 0.0
  %154 = vmatmul.mubr.f32.gmra.mxu0 %v60
  %v155 = vpop.f32.mrf.mxu0
  %v156 = vadd.f32 %v47, %v155
  %v157 = vpop.f32.mrf.mxu0
  %158 = vmatprep.mubr.f32.mxu0 0.0
  %159 = vmatmul.mubr.f32.gmra.mxu0 %v63
  %v160 = vpop.f32.mrf.mxu0
  %v161 = vadd.f32 %v47, %v160
  %v162 = vpop.f32.mrf.mxu0
  %163 = vmatprep.mubr.f32.mxu0 0.0
  %164 = vmatmul.mubr.f32.gmra.mxu0 %v66
  %v165 = vpop.f32.mrf.mxu0
  %v166 = vadd.f32 %v47, %v165
  %v167 = vpop.f32.mrf.mxu0
  %168 = vmatprep.mubr.f32.mxu0 0.0
  %169 = vmatmul.mubr.f32.gmra.mxu0 %v69
  %v170 = vpop.f32.mrf.mxu0
  %v171 = vadd.f32 %v47, %v170
  %v172 = vpop.f32.mrf.mxu0
  %173 = vmatprep.mubr.f32.mxu0 0.0
  %174 = vmatmul.mubr.f32.gmra.mxu0 %v72
  %v175 = vpop.f32.mrf.mxu0
  %v176 = vadd.f32 %v47, %v175
  %v177 = vpop.f32.mrf.mxu0
  %178 = vdwg.mxu0
  %v179 = vld [vmem:[%s4] sm:$0xff]
  %v180 = vld [vmem:[%s4 + $0x8] sm:$0xff]
  %v181 = vld [vmem:[%s4 + $0x10] sm:$0xff]
  %v182 = vld [vmem:[%s4 + $0x18] sm:$0xff]
  %v183 = vld [vmem:[%s1] sm:$0xff]
  %v184 = vld [vmem:[%s2] sm:$0xff]
  %vm185 = vcmask 261120
  %v187 = vsel %vm185, %v183, 0
  %189 = vmatprep.subr.mxu0 0.0
  %190 = vmatpush1.msra.mxu0 0.0
  %191 = vmatprep.subr.mxu0 0.0
  %192 = vmatpush1.msra.mxu0 0.0
  %193 = vmatprep.subr.mxu0 0.0
  %194 = vmatpush1.msra.mxu0 0.0
  %195 = vmatprep.subr.mxu0 0.0
  %196 = vmatpush1.msra.mxu0 0.0
  %197 = vmatprep.subr.mxu0 0.0
  %198 = vmatpush1.msra.mxu0 0.0
  %199 = vmatprep.subr.mxu0 0.0
  %200 = vmatpush1.msra.mxu0 0.0
  %201 = vmatprep.subr.mxu0 0.0
  %202 = vmatpush1.msra.mxu0 0.0
  %203 = vmatprep.subr.mxu0 0.0
  %204 = vmatpush1.msra.mxu0 0.0
  %205 = vmatprep.subr.mxu0 0.0
  %206 = vmatpush1.msra.mxu0 0.0
  %207 = vmatprep.subr.mxu0 0.0
  %208 = vmatpush1.msra.mxu0 0.0
  %209 = vmatprep.subr.mxu0 0.0
  %210 = vmatpush1.msra.mxu0 0.0
  %211 = vmatprep.subr.mxu0 0.0
  %212 = vmatpush1.msra.mxu0 0.0
  %213 = vmatprep.subr.mxu0 0.0
  %214 = vmatpush1.msra.mxu0 %v182
  %215 = vmatprep.subr.mxu0 0.0
  %216 = vmatpush1.msra.mxu0 %v181
  %217 = vmatprep.subr.mxu0 0.0
  %218 = vmatpush1.msra.mxu0 %v180
  %219 = vmatprep.subr.mxu0 0.0
  %220 = vmatpush1.msra.mxu0 %v179
  %221 = vmatprep.subr.mxu0 0.0
  %222 = vmatpush2.msra.mxu0 0.0
  %223 = vmatprep.subr.mxu0 0.0
  %224 = vmatpush2.msra.mxu0 0.0
  %225 = vmatprep.subr.mxu0 0.0
  %226 = vmatpush2.msra.mxu0 0.0
  %227 = vmatprep.subr.mxu0 0.0
  %228 = vmatpush2.msra.mxu0 0.0
  %229 = vmatprep.subr.mxu0 0.0
  %230 = vmatpush2.msra.mxu0 0.0
  %231 = vmatprep.subr.mxu0 0.0
  %232 = vmatpush2.msra.mxu0 0.0
  %233 = vmatprep.subr.mxu0 0.0
  %234 = vmatpush2.msra.mxu0 0.0
  %235 = vmatprep.subr.mxu0 0.0
  %236 = vmatpush2.msra.mxu0 0.0
  %237 = vmatprep.subr.mxu0 0.0
  %238 = vmatpush2.msra.mxu0 0.0
  %239 = vmatprep.subr.mxu0 0.0
  %240 = vmatpush2.msra.mxu0 0.0
  %241 = vmatprep.subr.mxu0 0.0
  %242 = vmatpush2.msra.mxu0 0.0
  %243 = vmatprep.subr.mxu0 0.0
  %244 = vmatpush2.msra.mxu0 0.0
  %245 = vmatprep.subr.mxu0 0.0
  %246 = vmatpush2.msra.mxu0 0.0
  %247 = vmatprep.subr.mxu0 0.0
  %248 = vmatpush2.msra.mxu0 0.0
  %249 = vmatprep.subr.mxu0 0.0
  %250 = vmatpush2.msra.mxu0 0.0
  %251 = vmatprep.subr.mxu0 0.0
  %252 = vmatpush2.msra.mxu0 0.0
  %253 = vmatprep.mubr.f32.mxu0 0.0
  %254 = vmatmul.mubr.f32.gmra.mxu0 %v187
  %v255 = vpop.f32.mrf.mxu0
  %v256 = vadd.f32 0.0, %v255
  %v257 = vpop.f32.mrf.mxu0
  %258 = vdwg.mxu0
  %v259 = vadd.f32 %v141, %v256
  %v260 = vxor.u32 %v259, 2147483648
  %v261 = vmul.f32 %v260, 1.442695
  %v262 = vpow.pop %v261
  %v263 = vadd.f32 %v262, 1.0
  %v264 = vrcp.pop %v263
  %v265 = vmul.f32 1.0, %v264
  %v266 = vtanh.pop %v259
  %268 = vrot.lane.b32.xlu0 %v184, 32
  %v269 = vpop.permute.xlu0 %268
  %v271 = vmul.f32 %v265, %v269
  %273 = vrot.lane.b32.xlu0 %v266, 64
  %v274 = vpop.permute.xlu0 %273
  %v276 = vmul.f32 %v265, %v274
  %278 = vrot.lane.b32.xlu0 %v276, 32
  %v279 = vpop.permute.xlu0 %278
  %v281 = vadd.f32 %v271, %v279
  %v282 = vtanh.pop %v281
  %284 = vrot.lane.b32.xlu0 %v282, 64
  %v285 = vpop.permute.xlu0 %284
  %v287 = vmul.f32 %v265, %v285
  %289 = vrot.lane.b32.xlu0 %v287, 32
  %v290 = vpop.permute.xlu0 %289
  %v291 = vsel %vm185, %v290, 0
  %293 = vmatprep.subr.mxu0 0.0
  %294 = vmatpush1.msra.mxu0 0.0
  %295 = vmatprep.subr.mxu0 0.0
  %296 = vmatpush1.msra.mxu0 0.0
  %297 = vmatprep.subr.mxu0 0.0
  %298 = vmatpush1.msra.mxu0 0.0
  %299 = vmatprep.subr.mxu0 0.0
  %300 = vmatpush1.msra.mxu0 0.0
  %301 = vmatprep.subr.mxu0 0.0
  %302 = vmatpush1.msra.mxu0 0.0
  %303 = vmatprep.subr.mxu0 0.0
  %304 = vmatpush1.msra.mxu0 0.0
  %305 = vmatprep.subr.mxu0 0.0
  %306 = vmatpush1.msra.mxu0 0.0
  %307 = vmatprep.subr.mxu0 0.0
  %308 = vmatpush1.msra.mxu0 0.0
  %309 = vmatprep.subr.mxu0 0.0
  %310 = vmatpush1.msra.mxu0 0.0
  %311 = vmatprep.subr.mxu0 0.0
  %312 = vmatpush1.msra.mxu0 0.0
  %313 = vmatprep.subr.mxu0 0.0
  %314 = vmatpush1.msra.mxu0 0.0
  %315 = vmatprep.subr.mxu0 0.0
  %316 = vmatpush1.msra.mxu0 0.0
  %317 = vmatprep.subr.mxu0 0.0
  %318 = vmatpush1.msra.mxu0 %v182
  %319 = vmatprep.subr.mxu0 0.0
  %320 = vmatpush1.msra.mxu0 %v181
  %321 = vmatprep.subr.mxu0 0.0
  %322 = vmatpush1.msra.mxu0 %v180
  %323 = vmatprep.subr.mxu0 0.0
  %324 = vmatpush1.msra.mxu0 %v179
  %325 = vmatprep.subr.mxu0 0.0
  %326 = vmatpush2.msra.mxu0 0.0
  %327 = vmatprep.subr.mxu0 0.0
  %328 = vmatpush2.msra.mxu0 0.0
  %329 = vmatprep.subr.mxu0 0.0
  %330 = vmatpush2.msra.mxu0 0.0
  %331 = vmatprep.subr.mxu0 0.0
  %332 = vmatpush2.msra.mxu0 0.0
  %333 = vmatprep.subr.mxu0 0.0
  %334 = vmatpush2.msra.mxu0 0.0
  %335 = vmatprep.subr.mxu0 0.0
  %336 = vmatpush2.msra.mxu0 0.0
  %337 = vmatprep.subr.mxu0 0.0
  %338 = vmatpush2.msra.mxu0 0.0
  %339 = vmatprep.subr.mxu0 0.0
  %340 = vmatpush2.msra.mxu0 0.0
  %341 = vmatprep.subr.mxu0 0.0
  %342 = vmatpush2.msra.mxu0 0.0
  %343 = vmatprep.subr.mxu0 0.0
  %344 = vmatpush2.msra.mxu0 0.0
  %345 = vmatprep.subr.mxu0 0.0
  %346 = vmatpush2.msra.mxu0 0.0
  %347 = vmatprep.subr.mxu0 0.0
  %348 = vmatpush2.msra.mxu0 0.0
  %349 = vmatprep.subr.mxu0 0.0
  %350 = vmatpush2.msra.mxu0 0.0
  %351 = vmatprep.subr.mxu0 0.0
  %352 = vmatpush2.msra.mxu0 0.0
  %353 = vmatprep.subr.mxu0 0.0
  %354 = vmatpush2.msra.mxu0 0.0
  %355 = vmatprep.subr.mxu0 0.0
  %356 = vmatpush2.msra.mxu0 0.0
  %357 = vmatprep.mubr.f32.mxu0 0.0
  %358 = vmatmul.mubr.f32.gmra.mxu0 %v291
  %v359 = vpop.f32.mrf.mxu0
  %v360 = vadd.f32 0.0, %v359
  %v361 = vpop.f32.mrf.mxu0
  %362 = vdwg.mxu0
  %v363 = vadd.f32 %v146, %v360
  %v364 = vxor.u32 %v363, 2147483648
  %v365 = vmul.f32 %v364, 1.442695
  %v366 = vpow.pop %v365
  %v367 = vadd.f32 %v366, 1.0
  %v368 = vrcp.pop %v367
  %v369 = vmul.f32 1.0, %v368
  %v370 = vtanh.pop %v363
  %v371 = vmul.f32 %v369, %v281
  %373 = vrot.lane.b32.xlu0 %v370, 64
  %v374 = vpop.permute.xlu0 %373
  %v376 = vmul.f32 %v369, %v374
  %378 = vrot.lane.b32.xlu0 %v376, 32
  %v379 = vpop.permute.xlu0 %378
  %v381 = vadd.f32 %v371, %v379
  %v382 = vtanh.pop %v381
  %384 = vrot.lane.b32.xlu0 %v382, 64
  %v385 = vpop.permute.xlu0 %384
  %v387 = vmul.f32 %v369, %v385
  %389 = vrot.lane.b32.xlu0 %v387, 32
  %v390 = vpop.permute.xlu0 %389
  %v391 = vsel %vm185, %v390, 0
  %393 = vmatprep.subr.mxu0 0.0
  %394 = vmatpush1.msra.mxu0 0.0
  %395 = vmatprep.subr.mxu0 0.0
  %396 = vmatpush1.msra.mxu0 0.0
  %397 = vmatprep.subr.mxu0 0.0
  %398 = vmatpush1.msra.mxu0 0.0
  %399 = vmatprep.subr.mxu0 0.0
  %400 = vmatpush1.msra.mxu0 0.0
  %401 = vmatprep.subr.mxu0 0.0
  %402 = vmatpush1.msra.mxu0 0.0
  %403 = vmatprep.subr.mxu0 0.0
  %404 = vmatpush1.msra.mxu0 0.0
  %405 = vmatprep.subr.mxu0 0.0
  %406 = vmatpush1.msra.mxu0 0.0
  %407 = vmatprep.subr.mxu0 0.0
  %408 = vmatpush1.msra.mxu0 0.0
  %409 = vmatprep.subr.mxu0 0.0
  %410 = vmatpush1.msra.mxu0 0.0
  %411 = vmatprep.subr.mxu0 0.0
  %412 = vmatpush1.msra.mxu0 0.0
  %413 = vmatprep.subr.mxu0 0.0
  %414 = vmatpush1.msra.mxu0 0.0
  %415 = vmatprep.subr.mxu0 0.0
  %416 = vmatpush1.msra.mxu0 0.0
  %417 = vmatprep.subr.mxu0 0.0
  %418 = vmatpush1.msra.mxu0 %v182
  %419 = vmatprep.subr.mxu0 0.0
  %420 = vmatpush1.msra.mxu0 %v181
  %421 = vmatprep.subr.mxu0 0.0
  %422 = vmatpush1.msra.mxu0 %v180
  %423 = vmatprep.subr.mxu0 0.0
  %424 = vmatpush1.msra.mxu0 %v179
  %425 = vmatprep.subr.mxu0 0.0
  %426 = vmatpush2.msra.mxu0 0.0
  %427 = vmatprep.subr.mxu0 0.0
  %428 = vmatpush2.msra.mxu0 0.0
  %429 = vmatprep.subr.mxu0 0.0
  %430 = vmatpush2.msra.mxu0 0.0
  %431 = vmatprep.subr.mxu0 0.0
  %432 = vmatpush2.msra.mxu0 0.0
  %433 = vmatprep.subr.mxu0 0.0
  %434 = vmatpush2.msra.mxu0 0.0
  %435 = vmatprep.subr.mxu0 0.0
  %436 = vmatpush2.msra.mxu0 0.0
  %437 = vmatprep.subr.mxu0 0.0
  %438 = vmatpush2.msra.mxu0 0.0
  %439 = vmatprep.subr.mxu0 0.0
  %440 = vmatpush2.msra.mxu0 0.0
  %441 = vmatprep.subr.mxu0 0.0
  %442 = vmatpush2.msra.mxu0 0.0
  %443 = vmatprep.subr.mxu0 0.0
  %444 = vmatpush2.msra.mxu0 0.0
  %445 = vmatprep.subr.mxu0 0.0
  %446 = vmatpush2.msra.mxu0 0.0
  %447 = vmatprep.subr.mxu0 0.0
  %448 = vmatpush2.msra.mxu0 0.0
  %449 = vmatprep.subr.mxu0 0.0
  %450 = vmatpush2.msra.mxu0 0.0
  %451 = vmatprep.subr.mxu0 0.0
  %452 = vmatpush2.msra.mxu0 0.0
  %453 = vmatprep.subr.mxu0 0.0
  %454 = vmatpush2.msra.mxu0 0.0
  %455 = vmatprep.subr.mxu0 0.0
  %456 = vmatpush2.msra.mxu0 0.0
  %457 = vmatprep.mubr.f32.mxu0 0.0
  %458 = vmatmul.mubr.f32.gmra.mxu0 %v391
  %v459 = vpop.f32.mrf.mxu0
  %v460 = vadd.f32 0.0, %v459
  %v461 = vpop.f32.mrf.mxu0
  %462 = vdwg.mxu0
  %v463 = vadd.f32 %v151, %v460
  %v464 = vxor.u32 %v463, 2147483648
  %v465 = vmul.f32 %v464, 1.442695
  %v466 = vpow.pop %v465
  %v467 = vadd.f32 %v466, 1.0
  %v468 = vrcp.pop %v467
  %v469 = vmul.f32 1.0, %v468
  %v470 = vtanh.pop %v463
  %v471 = vmul.f32 %v469, %v381
  %473 = vrot.lane.b32.xlu0 %v470, 64
  %v474 = vpop.permute.xlu0 %473
  %v476 = vmul.f32 %v469, %v474
  %478 = vrot.lane.b32.xlu0 %v476, 32
  %v479 = vpop.permute.xlu0 %478
  %v481 = vadd.f32 %v471, %v479
  %v482 = vtanh.pop %v481
  %484 = vrot.lane.b32.xlu0 %v482, 64
  %v485 = vpop.permute.xlu0 %484
  %v487 = vmul.f32 %v469, %v485
  %489 = vrot.lane.b32.xlu0 %v487, 32
  %v490 = vpop.permute.xlu0 %489
  %v491 = vsel %vm185, %v490, 0
  %493 = vmatprep.subr.mxu0 0.0
  %494 = vmatpush1.msra.mxu0 0.0
  %495 = vmatprep.subr.mxu0 0.0
  %496 = vmatpush1.msra.mxu0 0.0
  %497 = vmatprep.subr.mxu0 0.0
  %498 = vmatpush1.msra.mxu0 0.0
  %499 = vmatprep.subr.mxu0 0.0
  %500 = vmatpush1.msra.mxu0 0.0
  %501 = vmatprep.subr.mxu0 0.0
  %502 = vmatpush1.msra.mxu0 0.0
  %503 = vmatprep.subr.mxu0 0.0
  %504 = vmatpush1.msra.mxu0 0.0
  %505 = vmatprep.subr.mxu0 0.0
  %506 = vmatpush1.msra.mxu0 0.0
  %507 = vmatprep.subr.mxu0 0.0
  %508 = vmatpush1.msra.mxu0 0.0
  %509 = vmatprep.subr.mxu0 0.0
  %510 = vmatpush1.msra.mxu0 0.0
  %511 = vmatprep.subr.mxu0 0.0
  %512 = vmatpush1.msra.mxu0 0.0
  %513 = vmatprep.subr.mxu0 0.0
  %514 = vmatpush1.msra.mxu0 0.0
  %515 = vmatprep.subr.mxu0 0.0
  %516 = vmatpush1.msra.mxu0 0.0
  %517 = vmatprep.subr.mxu0 0.0
  %518 = vmatpush1.msra.mxu0 %v182
  %519 = vmatprep.subr.mxu0 0.0
  %520 = vmatpush1.msra.mxu0 %v181
  %521 = vmatprep.subr.mxu0 0.0
  %522 = vmatpush1.msra.mxu0 %v180
  %523 = vmatprep.subr.mxu0 0.0
  %524 = vmatpush1.msra.mxu0 %v179
  %525 = vmatprep.subr.mxu0 0.0
  %526 = vmatpush2.msra.mxu0 0.0
  %527 = vmatprep.subr.mxu0 0.0
  %528 = vmatpush2.msra.mxu0 0.0
  %529 = vmatprep.subr.mxu0 0.0
  %530 = vmatpush2.msra.mxu0 0.0
  %531 = vmatprep.subr.mxu0 0.0
  %532 = vmatpush2.msra.mxu0 0.0
  %533 = vmatprep.subr.mxu0 0.0
  %534 = vmatpush2.msra.mxu0 0.0
  %535 = vmatprep.subr.mxu0 0.0
  %536 = vmatpush2.msra.mxu0 0.0
  %537 = vmatprep.subr.mxu0 0.0
  %538 = vmatpush2.msra.mxu0 0.0
  %539 = vmatprep.subr.mxu0 0.0
  %540 = vmatpush2.msra.mxu0 0.0
  %541 = vmatprep.subr.mxu0 0.0
  %542 = vmatpush2.msra.mxu0 0.0
  %543 = vmatprep.subr.mxu0 0.0
  %544 = vmatpush2.msra.mxu0 0.0
  %545 = vmatprep.subr.mxu0 0.0
  %546 = vmatpush2.msra.mxu0 0.0
  %547 = vmatprep.subr.mxu0 0.0
  %548 = vmatpush2.msra.mxu0 0.0
  %549 = vmatprep.subr.mxu0 0.0
  %550 = vmatpush2.msra.mxu0 0.0
  %551 = vmatprep.subr.mxu0 0.0
  %552 = vmatpush2.msra.mxu0 0.0
  %553 = vmatprep.subr.mxu0 0.0
  %554 = vmatpush2.msra.mxu0 0.0
  %555 = vmatprep.subr.mxu0 0.0
  %556 = vmatpush2.msra.mxu0 0.0
  %557 = vmatprep.mubr.f32.mxu0 0.0
  %558 = vmatmul.mubr.f32.gmra.mxu0 %v491
  %v559 = vpop.f32.mrf.mxu0
  %v560 = vadd.f32 0.0, %v559
  %v561 = vpop.f32.mrf.mxu0
  %562 = vdwg.mxu0
  %v563 = vadd.f32 %v156, %v560
  %v564 = vxor.u32 %v563, 2147483648
  %v565 = vmul.f32 %v564, 1.442695
  %v566 = vpow.pop %v565
  %v567 = vadd.f32 %v566, 1.0
  %v568 = vrcp.pop %v567
  %v569 = vmul.f32 1.0, %v568
  %v570 = vtanh.pop %v563
  %v571 = vmul.f32 %v569, %v481
  %573 = vrot.lane.b32.xlu0 %v570, 64
  %v574 = vpop.permute.xlu0 %573
  %v576 = vmul.f32 %v569, %v574
  %578 = vrot.lane.b32.xlu0 %v576, 32
  %v579 = vpop.permute.xlu0 %578
  %v581 = vadd.f32 %v571, %v579
  %v582 = vtanh.pop %v581
  %584 = vrot.lane.b32.xlu0 %v582, 64
  %v585 = vpop.permute.xlu0 %584
  %v587 = vmul.f32 %v569, %v585
  %589 = vrot.lane.b32.xlu0 %v587, 32
  %v590 = vpop.permute.xlu0 %589
  %v591 = vsel %vm185, %v590, 0
  %593 = vmatprep.subr.mxu0 0.0
  %594 = vmatpush1.msra.mxu0 0.0
  %595 = vmatprep.subr.mxu0 0.0
  %596 = vmatpush1.msra.mxu0 0.0
  %597 = vmatprep.subr.mxu0 0.0
  %598 = vmatpush1.msra.mxu0 0.0
  %599 = vmatprep.subr.mxu0 0.0
  %600 = vmatpush1.msra.mxu0 0.0
  %601 = vmatprep.subr.mxu0 0.0
  %602 = vmatpush1.msra.mxu0 0.0
  %603 = vmatprep.subr.mxu0 0.0
  %604 = vmatpush1.msra.mxu0 0.0
  %605 = vmatprep.subr.mxu0 0.0
  %606 = vmatpush1.msra.mxu0 0.0
  %607 = vmatprep.subr.mxu0 0.0
  %608 = vmatpush1.msra.mxu0 0.0
  %609 = vmatprep.subr.mxu0 0.0
  %610 = vmatpush1.msra.mxu0 0.0
  %611 = vmatprep.subr.mxu0 0.0
  %612 = vmatpush1.msra.mxu0 0.0
  %613 = vmatprep.subr.mxu0 0.0
  %614 = vmatpush1.msra.mxu0 0.0
  %615 = vmatprep.subr.mxu0 0.0
  %616 = vmatpush1.msra.mxu0 0.0
  %617 = vmatprep.subr.mxu0 0.0
  %618 = vmatpush1.msra.mxu0 %v182
  %619 = vmatprep.subr.mxu0 0.0
  %620 = vmatpush1.msra.mxu0 %v181
  %621 = vmatprep.subr.mxu0 0.0
  %622 = vmatpush1.msra.mxu0 %v180
  %623 = vmatprep.subr.mxu0 0.0
  %624 = vmatpush1.msra.mxu0 %v179
  %625 = vmatprep.subr.mxu0 0.0
  %626 = vmatpush2.msra.mxu0 0.0
  %627 = vmatprep.subr.mxu0 0.0
  %628 = vmatpush2.msra.mxu0 0.0
  %629 = vmatprep.subr.mxu0 0.0
  %630 = vmatpush2.msra.mxu0 0.0
  %631 = vmatprep.subr.mxu0 0.0
  %632 = vmatpush2.msra.mxu0 0.0
  %633 = vmatprep.subr.mxu0 0.0
  %634 = vmatpush2.msra.mxu0 0.0
  %635 = vmatprep.subr.mxu0 0.0
  %636 = vmatpush2.msra.mxu0 0.0
  %637 = vmatprep.subr.mxu0 0.0
  %638 = vmatpush2.msra.mxu0 0.0
  %639 = vmatprep.subr.mxu0 0.0
  %640 = vmatpush2.msra.mxu0 0.0
  %641 = vmatprep.subr.mxu0 0.0
  %642 = vmatpush2.msra.mxu0 0.0
  %643 = vmatprep.subr.mxu0 0.0
  %644 = vmatpush2.msra.mxu0 0.0
  %645 = vmatprep.subr.mxu0 0.0
  %646 = vmatpush2.msra.mxu0 0.0
  %647 = vmatprep.subr.mxu0 0.0
  %648 = vmatpush2.msra.mxu0 0.0
  %649 = vmatprep.subr.mxu0 0.0
  %650 = vmatpush2.msra.mxu0 0.0
  %651 = vmatprep.subr.mxu0 0.0
  %652 = vmatpush2.msra.mxu0 0.0
  %653 = vmatprep.subr.mxu0 0.0
  %654 = vmatpush2.msra.mxu0 0.0
  %655 = vmatprep.subr.mxu0 0.0
  %656 = vmatpush2.msra.mxu0 0.0
  %657 = vmatprep.mubr.f32.mxu0 0.0
  %658 = vmatmul.mubr.f32.gmra.mxu0 %v591
  %v659 = vpop.f32.mrf.mxu0
  %v660 = vadd.f32 0.0, %v659
  %v661 = vpop.f32.mrf.mxu0
  %662 = vdwg.mxu0
  %v663 = vadd.f32 %v161, %v660
  %v664 = vxor.u32 %v663, 2147483648
  %v665 = vmul.f32 %v664, 1.442695
  %v666 = vpow.pop %v665
  %v667 = vadd.f32 %v666, 1.0
  %v668 = vrcp.pop %v667
  %v669 = vmul.f32 1.0, %v668
  %v670 = vtanh.pop %v663
  %v671 = vmul.f32 %v669, %v581
  %673 = vrot.lane.b32.xlu0 %v670, 64
  %v674 = vpop.permute.xlu0 %673
  %v676 = vmul.f32 %v669, %v674
  %678 = vrot.lane.b32.xlu0 %v676, 32
  %v679 = vpop.permute.xlu0 %678
  %v681 = vadd.f32 %v671, %v679
  %v682 = vtanh.pop %v681
  %684 = vrot.lane.b32.xlu0 %v682, 64
  %v685 = vpop.permute.xlu0 %684
  %v687 = vmul.f32 %v669, %v685
  %689 = vrot.lane.b32.xlu0 %v687, 32
  %v690 = vpop.permute.xlu0 %689
  %v691 = vsel %vm185, %v690, 0
  %693 = vmatprep.subr.mxu0 0.0
  %694 = vmatpush1.msra.mxu0 0.0
  %695 = vmatprep.subr.mxu0 0.0
  %696 = vmatpush1.msra.mxu0 0.0
  %697 = vmatprep.subr.mxu0 0.0
  %698 = vmatpush1.msra.mxu0 0.0
  %699 = vmatprep.subr.mxu0 0.0
  %700 = vmatpush1.msra.mxu0 0.0
  %701 = vmatprep.subr.mxu0 0.0
  %702 = vmatpush1.msra.mxu0 0.0
  %703 = vmatprep.subr.mxu0 0.0
  %704 = vmatpush1.msra.mxu0 0.0
  %705 = vmatprep.subr.mxu0 0.0
  %706 = vmatpush1.msra.mxu0 0.0
  %707 = vmatprep.subr.mxu0 0.0
  %708 = vmatpush1.msra.mxu0 0.0
  %709 = vmatprep.subr.mxu0 0.0
  %710 = vmatpush1.msra.mxu0 0.0
  %711 = vmatprep.subr.mxu0 0.0
  %712 = vmatpush1.msra.mxu0 0.0
  %713 = vmatprep.subr.mxu0 0.0
  %714 = vmatpush1.msra.mxu0 0.0
  %715 = vmatprep.subr.mxu0 0.0
  %716 = vmatpush1.msra.mxu0 0.0
  %717 = vmatprep.subr.mxu0 0.0
  %718 = vmatpush1.msra.mxu0 %v182
  %719 = vmatprep.subr.mxu0 0.0
  %720 = vmatpush1.msra.mxu0 %v181
  %721 = vmatprep.subr.mxu0 0.0
  %722 = vmatpush1.msra.mxu0 %v180
  %723 = vmatprep.subr.mxu0 0.0
  %724 = vmatpush1.msra.mxu0 %v179
  %725 = vmatprep.subr.mxu0 0.0
  %726 = vmatpush2.msra.mxu0 0.0
  %727 = vmatprep.subr.mxu0 0.0
  %728 = vmatpush2.msra.mxu0 0.0
  %729 = vmatprep.subr.mxu0 0.0
  %730 = vmatpush2.msra.mxu0 0.0
  %731 = vmatprep.subr.mxu0 0.0
  %732 = vmatpush2.msra.mxu0 0.0
  %733 = vmatprep.subr.mxu0 0.0
  %734 = vmatpush2.msra.mxu0 0.0
  %735 = vmatprep.subr.mxu0 0.0
  %736 = vmatpush2.msra.mxu0 0.0
  %737 = vmatprep.subr.mxu0 0.0
  %738 = vmatpush2.msra.mxu0 0.0
  %739 = vmatprep.subr.mxu0 0.0
  %740 = vmatpush2.msra.mxu0 0.0
  %741 = vmatprep.subr.mxu0 0.0
  %742 = vmatpush2.msra.mxu0 0.0
  %743 = vmatprep.subr.mxu0 0.0
  %744 = vmatpush2.msra.mxu0 0.0
  %745 = vmatprep.subr.mxu0 0.0
  %746 = vmatpush2.msra.mxu0 0.0
  %747 = vmatprep.subr.mxu0 0.0
  %748 = vmatpush2.msra.mxu0 0.0
  %749 = vmatprep.subr.mxu0 0.0
  %750 = vmatpush2.msra.mxu0 0.0
  %751 = vmatprep.subr.mxu0 0.0
  %752 = vmatpush2.msra.mxu0 0.0
  %753 = vmatprep.subr.mxu0 0.0
  %754 = vmatpush2.msra.mxu0 0.0
  %755 = vmatprep.subr.mxu0 0.0
  %756 = vmatpush2.msra.mxu0 0.0
  %757 = vmatprep.mubr.f32.mxu0 0.0
  %758 = vmatmul.mubr.f32.gmra.mxu0 %v691
  %v759 = vpop.f32.mrf.mxu0
  %v760 = vadd.f32 0.0, %v759
  %v761 = vpop.f32.mrf.mxu0
  %762 = vdwg.mxu0
  %v763 = vadd.f32 %v166, %v760
  %v764 = vxor.u32 %v763, 2147483648
  %v765 = vmul.f32 %v764, 1.442695
  %v766 = vpow.pop %v765
  %v767 = vadd.f32 %v766, 1.0
  %v768 = vrcp.pop %v767
  %v769 = vmul.f32 1.0, %v768
  %v770 = vtanh.pop %v763
  %v771 = vmul.f32 %v769, %v681
  %773 = vrot.lane.b32.xlu0 %v770, 64
  %v774 = vpop.permute.xlu0 %773
  %v776 = vmul.f32 %v769, %v774
  %778 = vrot.lane.b32.xlu0 %v776, 32
  %v779 = vpop.permute.xlu0 %778
  %v781 = vadd.f32 %v771, %v779
  %v782 = vtanh.pop %v781
  %784 = vrot.lane.b32.xlu0 %v782, 64
  %v785 = vpop.permute.xlu0 %784
  %v787 = vmul.f32 %v769, %v785
  %789 = vrot.lane.b32.xlu0 %v787, 32
  %v790 = vpop.permute.xlu0 %789
  %v791 = vsel %vm185, %v790, 0
  %793 = vmatprep.subr.mxu0 0.0
  %794 = vmatpush1.msra.mxu0 0.0
  %795 = vmatprep.subr.mxu0 0.0
  %796 = vmatpush1.msra.mxu0 0.0
  %797 = vmatprep.subr.mxu0 0.0
  %798 = vmatpush1.msra.mxu0 0.0
  %799 = vmatprep.subr.mxu0 0.0
  %800 = vmatpush1.msra.mxu0 0.0
  %801 = vmatprep.subr.mxu0 0.0
  %802 = vmatpush1.msra.mxu0 0.0
  %803 = vmatprep.subr.mxu0 0.0
  %804 = vmatpush1.msra.mxu0 0.0
  %805 = vmatprep.subr.mxu0 0.0
  %806 = vmatpush1.msra.mxu0 0.0
  %807 = vmatprep.subr.mxu0 0.0
  %808 = vmatpush1.msra.mxu0 0.0
  %809 = vmatprep.subr.mxu0 0.0
  %810 = vmatpush1.msra.mxu0 0.0
  %811 = vmatprep.subr.mxu0 0.0
  %812 = vmatpush1.msra.mxu0 0.0
  %813 = vmatprep.subr.mxu0 0.0
  %814 = vmatpush1.msra.mxu0 0.0
  %815 = vmatprep.subr.mxu0 0.0
  %816 = vmatpush1.msra.mxu0 0.0
  %817 = vmatprep.subr.mxu0 0.0
  %818 = vmatpush1.msra.mxu0 %v182
  %819 = vmatprep.subr.mxu0 0.0
  %820 = vmatpush1.msra.mxu0 %v181
  %821 = vmatprep.subr.mxu0 0.0
  %822 = vmatpush1.msra.mxu0 %v180
  %823 = vmatprep.subr.mxu0 0.0
  %824 = vmatpush1.msra.mxu0 %v179
  %825 = vmatprep.subr.mxu0 0.0
  %826 = vmatpush2.msra.mxu0 0.0
  %827 = vmatprep.subr.mxu0 0.0
  %828 = vmatpush2.msra.mxu0 0.0
  %829 = vmatprep.subr.mxu0 0.0
  %830 = vmatpush2.msra.mxu0 0.0
  %831 = vmatprep.subr.mxu0 0.0
  %832 = vmatpush2.msra.mxu0 0.0
  %833 = vmatprep.subr.mxu0 0.0
  %834 = vmatpush2.msra.mxu0 0.0
  %835 = vmatprep.subr.mxu0 0.0
  %836 = vmatpush2.msra.mxu0 0.0
  %837 = vmatprep.subr.mxu0 0.0
  %838 = vmatpush2.msra.mxu0 0.0
  %839 = vmatprep.subr.mxu0 0.0
  %840 = vmatpush2.msra.mxu0 0.0
  %841 = vmatprep.subr.mxu0 0.0
  %842 = vmatpush2.msra.mxu0 0.0
  %843 = vmatprep.subr.mxu0 0.0
  %844 = vmatpush2.msra.mxu0 0.0
  %845 = vmatprep.subr.mxu0 0.0
  %846 = vmatpush2.msra.mxu0 0.0
  %847 = vmatprep.subr.mxu0 0.0
  %848 = vmatpush2.msra.mxu0 0.0
  %849 = vmatprep.subr.mxu0 0.0
  %850 = vmatpush2.msra.mxu0 0.0
  %851 = vmatprep.subr.mxu0 0.0
  %852 = vmatpush2.msra.mxu0 0.0
  %853 = vmatprep.subr.mxu0 0.0
  %854 = vmatpush2.msra.mxu0 0.0
  %855 = vmatprep.subr.mxu0 0.0
  %856 = vmatpush2.msra.mxu0 0.0
  %857 = vmatprep.mubr.f32.mxu0 0.0
  %858 = vmatmul.mubr.f32.gmra.mxu0 %v791
  %v859 = vpop.f32.mrf.mxu0
  %v860 = vadd.f32 0.0, %v859
  %v861 = vpop.f32.mrf.mxu0
  %862 = vdwg.mxu0
  %v863 = vadd.f32 %v171, %v860
  %v864 = vxor.u32 %v863, 2147483648
  %v865 = vmul.f32 %v864, 1.442695
  %v866 = vpow.pop %v865
  %v867 = vadd.f32 %v866, 1.0
  %v868 = vrcp.pop %v867
  %v869 = vmul.f32 1.0, %v868
  %v870 = vtanh.pop %v863
  %v871 = vmul.f32 %v869, %v781
  %873 = vrot.lane.b32.xlu0 %v870, 64
  %v874 = vpop.permute.xlu0 %873
  %v876 = vmul.f32 %v869, %v874
  %878 = vrot.lane.b32.xlu0 %v876, 32
  %v879 = vpop.permute.xlu0 %878
  %v881 = vadd.f32 %v871, %v879
  %v882 = vtanh.pop %v881
  %884 = vrot.lane.b32.xlu0 %v882, 64
  %v885 = vpop.permute.xlu0 %884
  %v887 = vmul.f32 %v869, %v885
  %889 = vrot.lane.b32.xlu0 %v887, 32
  %v890 = vpop.permute.xlu0 %889
  %v891 = vsel %vm185, %v890, 0
  %893 = vmatprep.subr.mxu0 0.0
  %894 = vmatpush1.msra.mxu0 0.0
  %895 = vmatprep.subr.mxu0 0.0
  %896 = vmatpush1.msra.mxu0 0.0
  %897 = vmatprep.subr.mxu0 0.0
  %898 = vmatpush1.msra.mxu0 0.0
  %899 = vmatprep.subr.mxu0 0.0
  %900 = vmatpush1.msra.mxu0 0.0
  %901 = vmatprep.subr.mxu0 0.0
  %902 = vmatpush1.msra.mxu0 0.0
  %903 = vmatprep.subr.mxu0 0.0
  %904 = vmatpush1.msra.mxu0 0.0
  %905 = vmatprep.subr.mxu0 0.0
  %906 = vmatpush1.msra.mxu0 0.0
  %907 = vmatprep.subr.mxu0 0.0
  %908 = vmatpush1.msra.mxu0 0.0
  %909 = vmatprep.subr.mxu0 0.0
  %910 = vmatpush1.msra.mxu0 0.0
  %911 = vmatprep.subr.mxu0 0.0
  %912 = vmatpush1.msra.mxu0 0.0
  %913 = vmatprep.subr.mxu0 0.0
  %914 = vmatpush1.msra.mxu0 0.0
  %915 = vmatprep.subr.mxu0 0.0
  %916 = vmatpush1.msra.mxu0 0.0
  %917 = vmatprep.subr.mxu0 0.0
  %918 = vmatpush1.msra.mxu0 %v182
  %919 = vmatprep.subr.mxu0 0.0
  %920 = vmatpush1.msra.mxu0 %v181
  %921 = vmatprep.subr.mxu0 0.0
  %922 = vmatpush1.msra.mxu0 %v180
  %923 = vmatprep.subr.mxu0 0.0
  %924 = vmatpush1.msra.mxu0 %v179
  %925 = vmatprep.subr.mxu0 0.0
  %926 = vmatpush2.msra.mxu0 0.0
  %927 = vmatprep.subr.mxu0 0.0
  %928 = vmatpush2.msra.mxu0 0.0
  %929 = vmatprep.subr.mxu0 0.0
  %930 = vmatpush2.msra.mxu0 0.0
  %931 = vmatprep.subr.mxu0 0.0
  %932 = vmatpush2.msra.mxu0 0.0
  %933 = vmatprep.subr.mxu0 0.0
  %934 = vmatpush2.msra.mxu0 0.0
  %935 = vmatprep.subr.mxu0 0.0
  %936 = vmatpush2.msra.mxu0 0.0
  %937 = vmatprep.subr.mxu0 0.0
  %938 = vmatpush2.msra.mxu0 0.0
  %939 = vmatprep.subr.mxu0 0.0
  %940 = vmatpush2.msra.mxu0 0.0
  %941 = vmatprep.subr.mxu0 0.0
  %942 = vmatpush2.msra.mxu0 0.0
  %943 = vmatprep.subr.mxu0 0.0
  %944 = vmatpush2.msra.mxu0 0.0
  %945 = vmatprep.subr.mxu0 0.0
  %946 = vmatpush2.msra.mxu0 0.0
  %947 = vmatprep.subr.mxu0 0.0
  %948 = vmatpush2.msra.mxu0 0.0
  %949 = vmatprep.subr.mxu0 0.0
  %950 = vmatpush2.msra.mxu0 0.0
  %951 = vmatprep.subr.mxu0 0.0
  %952 = vmatpush2.msra.mxu0 0.0
  %953 = vmatprep.subr.mxu0 0.0
  %954 = vmatpush2.msra.mxu0 0.0
  %955 = vmatprep.subr.mxu0 0.0
  %956 = vmatpush2.msra.mxu0 0.0
  %957 = vmatprep.mubr.f32.mxu0 0.0
  %958 = vmatmul.mubr.f32.gmra.mxu0 %v891
  %v959 = vpop.f32.mrf.mxu0
  %v960 = vadd.f32 0.0, %v959
  %v961 = vpop.f32.mrf.mxu0
  %962 = vdwg.mxu0
  %v963 = vadd.f32 %v176, %v960
  %v964 = vxor.u32 %v963, 2147483648
  %v965 = vmul.f32 %v964, 1.442695
  %v966 = vpow.pop %v965
  %v967 = vadd.f32 %v966, 1.0
  %v968 = vrcp.pop %v967
  %v969 = vmul.f32 1.0, %v968
  %v970 = vtanh.pop %v963
  %v971 = vmul.f32 %v969, %v881
  %973 = vrot.lane.b32.xlu0 %v970, 64
  %v974 = vpop.permute.xlu0 %973
  %v976 = vmul.f32 %v969, %v974
  %978 = vrot.lane.b32.xlu0 %v976, 32
  %v979 = vpop.permute.xlu0 %978
  %v981 = vadd.f32 %v971, %v979
  %v982 = vtanh.pop %v981
  %984 = vrot.lane.b32.xlu0 %v982, 64
  %v985 = vpop.permute.xlu0 %984
  %v987 = vmul.f32 %v969, %v985
  %989 = vrot.lane.b32.xlu0 %v987, 32
  %v990 = vpop.permute.xlu0 %989
  %992 = vst.msk [vmem:[%s9] sm:$0xff] %vm185, %v990
  %994 = vrot.lane.b32.xlu0 %v981, 96
  %v995 = vpop.permute.xlu0 %994
  %997 = vst.msk [vmem:[%s10] sm:$0xff] %vm185, %v995
  %v998 = vld [vmem:[%s6] sm:$0xff]
  %v999 = vld [vmem:[%s6 + $0x8] sm:$0xff]
  %v1000 = vld [vmem:[%s6 + $0x10] sm:$0xff]
  %v1001 = vld [vmem:[%s6 + $0x18] sm:$0xff]
  %v1002 = vld [vmem:[%s7] sm:$0x1]
  %v1004 = vlaneseq
  %v1005 = vshrl.u32 %v1004, 7
  %v1006 = vsub.s32 0, %v1005
  %v1007 = vrot.slane %v1002, %v1006
  %v1009 = vsel %vm185, %v990, 0
  %1011 = vmatprep.subr.mxu0 0.0
  %1012 = vmatpush1.msra.mxu0 0.0
  %1013 = vmatprep.subr.mxu0 0.0
  %1014 = vmatpush1.msra.mxu0 0.0
  %1015 = vmatprep.subr.mxu0 0.0
  %1016 = vmatpush1.msra.mxu0 0.0
  %1017 = vmatprep.subr.mxu0 0.0
  %1018 = vmatpush1.msra.mxu0 0.0
  %1019 = vmatprep.subr.mxu0 0.0
  %1020 = vmatpush1.msra.mxu0 0.0
  %1021 = vmatprep.subr.mxu0 0.0
  %1022 = vmatpush1.msra.mxu0 0.0
  %1023 = vmatprep.subr.mxu0 0.0
  %1024 = vmatpush1.msra.mxu0 0.0
  %1025 = vmatprep.subr.mxu0 0.0
  %1026 = vmatpush1.msra.mxu0 0.0
  %1027 = vmatprep.subr.mxu0 0.0
  %1028 = vmatpush1.msra.mxu0 0.0
  %1029 = vmatprep.subr.mxu0 0.0
  %1030 = vmatpush1.msra.mxu0 0.0
  %1031 = vmatprep.subr.mxu0 0.0
  %1032 = vmatpush1.msra.mxu0 0.0
  %1033 = vmatprep.subr.mxu0 0.0
  %1034 = vmatpush1.msra.mxu0 0.0
  %1035 = vmatprep.subr.mxu0 0.0
  %1036 = vmatpush1.msra.mxu0 %v1001
  %1037 = vmatprep.subr.mxu0 0.0
  %1038 = vmatpush1.msra.mxu0 %v1000
  %1039 = vmatprep.subr.mxu0 0.0
  %1040 = vmatpush1.msra.mxu0 %v999
  %1041 = vmatprep.subr.mxu0 0.0
  %1042 = vmatpush1.msra.mxu0 %v998
  %1043 = vmatprep.subr.mxu0 0.0
  %1044 = vmatpush2.msra.mxu0 0.0
  %1045 = vmatprep.subr.mxu0 0.0
  %1046 = vmatpush2.msra.mxu0 0.0
  %1047 = vmatprep.subr.mxu0 0.0
  %1048 = vmatpush2.msra.mxu0 0.0
  %1049 = vmatprep.subr.mxu0 0.0
  %1050 = vmatpush2.msra.mxu0 0.0
  %1051 = vmatprep.subr.mxu0 0.0
  %1052 = vmatpush2.msra.mxu0 0.0
  %1053 = vmatprep.subr.mxu0 0.0
  %1054 = vmatpush2.msra.mxu0 0.0
  %1055 = vmatprep.subr.mxu0 0.0
  %1056 = vmatpush2.msra.mxu0 0.0
  %1057 = vmatprep.subr.mxu0 0.0
  %1058 = vmatpush2.msra.mxu0 0.0
  %1059 = vmatprep.subr.mxu0 0.0
  %1060 = vmatpush2.msra.mxu0 0.0
  %1061 = vmatprep.subr.mxu0 0.0
  %1062 = vmatpush2.msra.mxu0 0.0
  %1063 = vmatprep.subr.mxu0 0.0
  %1064 = vmatpush2.msra.mxu0 0.0
  %1065 = vmatprep.subr.mxu0 0.0
  %1066 = vmatpush2.msra.mxu0 0.0
  %1067 = vmatprep.subr.mxu0 0.0
  %1068 = vmatpush2.msra.mxu0 0.0
  %1069 = vmatprep.subr.mxu0 0.0
  %1070 = vmatpush2.msra.mxu0 0.0
  %1071 = vmatprep.subr.mxu0 0.0
  %1072 = vmatpush2.msra.mxu0 0.0
  %1073 = vmatprep.subr.mxu0 0.0
  %1074 = vmatpush2.msra.mxu0 0.0
  %1075 = vmatprep.mubr.f32.mxu0 0.0
  %1076 = vmatmul.mubr.f32.gmra.mxu0 %v1009
  %v1077 = vpop.f32.mrf.mxu0
  %v1078 = vadd.f32 %v1007, %v1077
  %v1079 = vpop.f32.mrf.mxu0
  %1080 = vdwg.mxu0
  %1081 = vmax.xlane.f32.xlu0 %v1078
  %v1082 = vpop.xlane.xlu0 %1081
  %v1083 = vsub.f32 %v1078, %v1082
  %v1084 = vmul.f32 %v1083, 1.442695
  %v1085 = vpow.pop %v1084
  %1086 = vadd.xlane.f32.xlu0 %v1085
  %v1087 = vpop.xlane.xlu0 %1086
  %v1088 = vlog2.pop %v1087
  %v1089 = vmul.f32 %v1088, 0.6931472
  %v1090 = vsub.f32 %v1083, %v1089
  %1091 = vst [vmem:[%s8] sm:$0xff] %v1090
  // Predicated region
  $region34: #{lstm_model_forward.1} parent=0 // pred_check
    _
  $region35: #{lstm_model_forward.1} parent=0 // pred_check_branch
    %1093 = sbr.rel (0) target = $region37
  $region36: #{lstm_model_forward.1} parent=0 // pred_region
    _
  $region37: #{lstm_model_forward.1} parent=0 // pred_fallthru
    _
  // Predicated region
  $region38: #{lstm_model_forward.1} parent=0 // pred_check
    _
  $region39: #{lstm_model_forward.1} parent=0 // pred_check_branch
    %1095 = sbr.rel (0) target = $region41
  $region40: #{lstm_model_forward.1} parent=0 // pred_region
    _
  $region41: #{lstm_model_forward.1} parent=0 // pred_fallthru
    _
  // Predicated region
  $region42: #{lstm_model_forward.1} parent=0 // pred_check
    _
  $region43: #{lstm_model_forward.1} parent=0 // pred_check_branch
    %1097 = sbr.rel (0) target = $region45
  $region44: #{lstm_model_forward.1} parent=0 // pred_region
    _
  $region45: #{lstm_model_forward.1} parent=0 // pred_fallthru
    _
  // Predicated region
  $region46: #{lstm_model_forward.1} parent=0 // pred_check
    _
  $region47: #{lstm_model_forward.1} parent=0 // pred_check_branch
    %1099 = sbr.rel (0) target = $region49
  $region48: #{lstm_model_forward.1} parent=0 // pred_region
    _
  $region49: #{lstm_model_forward.1} parent=0 // pred_fallthru
    _
  // Predicated region
  $region50: #{lstm_model_forward.1} parent=0 // pred_check
    _
  $region51: #{lstm_model_forward.1} parent=0 // pred_check_branch
    %1101 = sbr.rel (0) target = $region53
  $region52: #{lstm_model_forward.1} parent=0 // pred_region
    _
  $region53: #{lstm_model_forward.1} parent=0 // pred_fallthru
    _
  // Predicated region
  $region54: #{lstm_model_forward.1} parent=0 // pred_check
    _
  $region55: #{lstm_model_forward.1} parent=0 // pred_check_branch
    %1103 = sbr.rel (0) target = $region57
  $region56: #{lstm_model_forward.1} parent=0 // pred_region
    _
  $region57: #{lstm_model_forward.1} parent=0 // pred_fallthru
    _

</llo_original>
